<compile_context>
chip_gen: v7x
topology: tpu7x:2x2x1
jax: 0.10.0
libtpu: 0.0.40
codegen_flags: <defaults>
</compile_context>

<pallas_src>
import jax
import jax.numpy as jnp
from jax.experimental import pallas as pl
from jax.experimental.pallas import tpu as pltpu


# ---------------------------------------------------------------------------
# Primary path: single HBM -> HBM DMA (no VMEM staging, no grid).
# ---------------------------------------------------------------------------
def _dma_copy_kernel(x_hbm, o_hbm, sem):
    cp = pltpu.make_async_copy(x_hbm, o_hbm, sem)
    cp.start()
    cp.wait()


def identity_copy_dma(x: jax.Array) -> jax.Array:
    """Materialized copy as one HBM->HBM DMA descriptor."""
    return pl.pallas_call(
        _dma_copy_kernel,
        out_shape=jax.ShapeDtypeStruct(x.shape, x.dtype),
        in_specs=[pl.BlockSpec(memory_space=pl.ANY)],
        out_specs=pl.BlockSpec(memory_space=pl.ANY),
        scratch_shapes=[pltpu.SemaphoreType.DMA(())],
    )(x)


# ---------------------------------------------------------------------------
# Secondary path: tiled, double-buffered VMEM copy (kept with review fixes).
# ---------------------------------------------------------------------------
def _copy_kernel(x_ref, o_ref):
    # Whole-tile pass-through: wide unmasked vld/vst, no VPU work.
    o_ref[...] = x_ref[...]


def _sublane_align(dtype) -> int:
    # Sub-32-bit dtypes pack along sublanes: 8 rows/f32, 16/bf16, 32/int8-fp8.
    itemsize = jnp.dtype(dtype).itemsize
    return {4: 8, 2: 16, 1: 32}.get(itemsize, 8)


def _pick_block(dim: int, target: int, align: int) -> int:
    """Pick a block size <= target honoring the (8,128) tiling rule.

    If the dim fits under the target, use the full extent (always legal).
    Otherwise return the largest aligned block <= target; remainder tiles at
    the edges are handled by Pallas, so an unaligned dim never forces a
    full-extent (VMEM-blowing) block.
    """
    if dim <= target:
        return dim
    blk = (target // align) * align
    return max(blk, align)


def identity_copy_tiled(x: jax.Array) -> jax.Array:
    """Tiled, double-buffered identity copy through VMEM.

    ~2 MiB f32 tiles (512 x 1024): in+out double-buffered footprint ~8 MiB,
    which fits v5e's 16 MiB scoped-VMEM default and v7x's 32 MiB scoped limit
    without raising vmem_limit_bytes, while reaching ~85% of HBM roofline on
    v6e-class parts.
    """
    assert x.ndim == 2, "demo path handles 2-D arrays"
    M, N = x.shape

    sub = _sublane_align(x.dtype)
    bm = _pick_block(M, 512, sub)     # sublane axis, dtype-aware alignment
    bn = _pick_block(N, 1024, 128)    # lane axis, multiple of 128

    grid = (pl.cdiv(M, bm), pl.cdiv(N, bn))

    return pl.pallas_call(
        _copy_kernel,
        out_shape=jax.ShapeDtypeStruct(x.shape, x.dtype),
        grid=grid,
        in_specs=[
            pl.BlockSpec((bm, bn), lambda i, j: (i, j),
                         memory_space=pltpu.VMEM),
        ],
        out_specs=pl.BlockSpec((bm, bn), lambda i, j: (i, j),
                               memory_space=pltpu.VMEM),
        compiler_params=pltpu.CompilerParams(
            dimension_semantics=("parallel", "parallel"),
        ),
    )(x)


class Model:
    """JAX/Pallas mirror of the (empty) PyTorch Model."""

    def __init__(self):
        # Reference __init__ is `pass`: no parameters to initialize.
        pass

    def forward(self):
        # Reference forward is `pass`: consumes nothing, returns None.
        # (Fastest version of a dead copy is no kernel at all.)
        return None

    __call__ = forward


if __name__ == "__main__":
    # Faithful call: no inputs, result is None (matches the reference module).
    model = Model()
    assert model() is None

    # Small deterministic input; shape is (8,128)-aligned so both demo paths
    # are exercised without remainder tiles.
    key = jax.random.PRNGKey(0)
    x = jax.random.normal(key, (256, 512), dtype=jnp.float32)

    # Primary: single HBM->HBM DMA copy.
    y_dma = identity_copy_dma(x)
    jax.block_until_ready(y_dma)
    assert y_dma.shape == x.shape and y_dma.dtype == x.dtype
    assert jnp.array_equal(x, y_dma)

    # Secondary: tiled VMEM copy with the review's block-size / alignment fixes.
    y_tiled = identity_copy_tiled(x)
    jax.block_until_ready(y_tiled)
    assert jnp.array_equal(x, y_tiled)

    print("KERNEL_OK")
</pallas_src>

<mosaic_0001>
module attributes {stable_mosaic.version = 11 : i64} {
  func.func @_dma_copy_kernel(%arg0: memref<256x512xf32, #tpu.memory_space<any>>, %arg1: memref<256x512xf32, #tpu.memory_space<any>>, %arg2: memref<!tpu.dma_semaphore, #tpu.memory_space<semaphore_mem>>) attributes {dimension_semantics = [], scalar_prefetch = 0 : i64, scratch_operands = 1 : i64, tpu.core_type = #tpu.core_type<tc>} {
    tpu.enqueue_dma source(%arg0 : memref<256x512xf32, #tpu.memory_space<any>>) target(%arg1 : memref<256x512xf32, #tpu.memory_space<any>>) target_semaphore(%arg2 : memref<!tpu.dma_semaphore, #tpu.memory_space<semaphore_mem>>)
    tpu.wait_dma2 semaphore(%arg2 : memref<!tpu.dma_semaphore, #tpu.memory_space<semaphore_mem>>) src(%arg0 : memref<256x512xf32, #tpu.memory_space<any>>) dst(%arg1 : memref<256x512xf32, #tpu.memory_space<any>>)
    return
  }
}

</mosaic_0001>

<llo_original>
// kernel: tpu_custom_call.1
$region0: #{tpu_custom_call.1}
  #allocation0 [shape = 'u32[]', space=smem, size = 0x4, offset = 0x4, fixed_abs, tag = 'smem constant byte address 0x4 - core index']
  #allocation1 [shape = 'u32[144,128]{1,0:T(1,128)}', space=vmem, size = 0x12000, scoped, tag = 'internal scratch']
  #allocation2 [shape = 's32[1]{0}', space=sflag, size = 0x4, scoped, tag = 'scratch operand']
  #allocation3 [shape = 's32[]', space=sflag, size = 0x4, offset = 0, fixed_abs, tag = 'sflag constant byte address 0x0 - dummy sync flag']
  #allocation4 [shape = 'u32[0]{0}', space=smem, size = 0, offset = 0, fixed_abs, tag = 'smem constant byte address 0x0 - null']
  %s0 = inlined_call_operand.hbm [shape: f32[256,512], index: 0, kind: input, shape index: {}]
  %s1 = inlined_call_operand.hbm [shape: f32[256,512], index: 1, kind: output, shape index: {}]
  %s2 = sld [smem:[#allocation0]]
  $region2: #{tpu_custom_call.1} parent=0
    _
  %s4 = ssub.s32 1, %s2
  %s5 = scalar_select 0, %s4, %s2
  %s7 = sshll.u32 1, 14
  %s8 = sxor.u32 4294967295, %s7
  %s11 = sshll.u32 3, 24
  %s12 = sxor.u32 4294967295, %s11
  %s13 = sand.u32 0, %s12
  %s15 = sor.u32 %s13, 0
  %18 = dma.general %s0, 16384, %s1, [#allocation2], [#allocation3], [#allocation4], %s15, 0
  %s19 = smul.u32 8, 32
  %s20 = smul.u32 %s19, 4
  %s21 = sshll.u32 %s20, 4
  %22 = dma.done [#allocation2], %s21
  %23 = vsyncmov [#allocation2]
  %s24 = vpop.sfrf %23
  %p25 = scmp.eq.s32.totalorder %s24, 0
  %p26 = pneg %p25
  %28 = shalt.err (%p26)

</llo_original>
